<compile_context>
chip_gen: v6e
topology: v6e:2x2x1
jax: 0.10.0
libtpu: 0.0.40
codegen_flags: <defaults>
</compile_context>

<pallas_src>
import functools

import jax
import jax.numpy as jnp
from jax.experimental import pallas as pl
from jax.experimental.pallas import tpu as pltpu

# Dimension-semantics constants (with defensive fallbacks to the string forms).
_PARALLEL = getattr(pltpu, "PARALLEL", "parallel")
_ARBITRARY = getattr(pltpu, "ARBITRARY", "arbitrary")
_CORE_PARALLEL = getattr(pltpu, "CORE_PARALLEL", _PARALLEL)


def _round_up(x, m):
    return -(-x // m) * m


@functools.lru_cache(maxsize=1)
def _device_config():
    """Per-generation tiling / core-split configuration (trace-time only)."""
    kind = ""
    try:
        kind = jax.devices()[0].device_kind.lower()
    except Exception:
        pass
    if "v7" in kind:
        # 2 TensorCores/chip, 64 MiB VMEM per TC, ~3.2 TB/s HBM per TC.
        return {"ncores": 2, "block_elems": 4096 * 512, "vmem_limit": 28 << 20}
    if "v6" in kind:
        # 1 TensorCore, 128 MiB VMEM (32 MiB scoped default), ~1.4 TB/s HBM.
        return {"ncores": 1, "block_elems": 4096 * 512, "vmem_limit": 30 << 20}
    # v5e / unknown: stay inside the 16 MiB scoped-VMEM default.
    return {"ncores": 1, "block_elems": 2048 * 512, "vmem_limit": None}


def _compiler_params(dimension_semantics, vmem_limit):
    kwargs = dict(dimension_semantics=dimension_semantics)
    if vmem_limit is not None:
        kwargs["vmem_limit_bytes"] = vmem_limit
    return pltpu.CompilerParams(**kwargs)


# ----------------------------------------------------------------------------
# Layout helpers
# ----------------------------------------------------------------------------
def _geometry(n, block_elems):
    """Pick (lanes, padded_n, rows, tile_rows, n_blocks) for n flat elements."""
    if n % 512 == 0:
        lanes, padded = 512, n            # free reshape, no copy
    elif n % 128 == 0:
        lanes, padded = 128, n            # free reshape, no copy
    else:
        lanes = 512
        padded = _round_up(n, lanes)      # fallback: one small zero-pad copy
    rows = padded // lanes
    # tile rows: multiple of 32 (int8 sublane packing), capped at block_elems.
    tile_rows = min(_round_up(rows, 32), block_elems // lanes)
    n_blocks = -(-rows // tile_rows)
    return lanes, padded, rows, tile_rows, n_blocks


def _prepare(x, cfg):
    """Flatten x to a lane-dense 2D slab (zero-copy when x.size % 128 == 0)."""
    n = x.size
    lanes, padded, rows, tile_rows, n_blocks = _geometry(n, cfg["block_elems"])
    flat = x.reshape(-1)
    if flat.dtype != jnp.float32:
        flat = flat.astype(jnp.float32)
    if padded != n:
        # TODO(synk): x.size not a multiple of 128 -> one host-side pad copy.
        flat = jnp.pad(flat, (0, padded - n))
    return flat.reshape(rows, lanes), n, tile_rows, n_blocks


def _core_split(n_blocks, ncores):
    """Use the explicit per-core split only when it divides evenly."""
    return ncores if (ncores > 1 and n_blocks % ncores == 0) else 1


def _restore_shape(q2d, shape, n):
    if q2d.size == n:                     # common case: free reshape
        return q2d.reshape(shape)
    return q2d.reshape(-1)[:n].reshape(shape)   # fallback-pad case only


# ----------------------------------------------------------------------------
# Kernel 1: global min / max reduction (hot path of update_min_max_stats)
# ----------------------------------------------------------------------------
def _minmax_kernel(x_ref, min_ref, max_ref, min_sc, max_sc, *, n_valid):
    c = pl.program_id(0)
    j = pl.program_id(1)
    tpc = pl.num_programs(1)
    gblk = c * tpc + j
    last = pl.num_programs(0) * tpc - 1
    tr, ln = x_ref.shape

    @pl.when(j == 0)
    def _():
        min_sc[...] = jnp.full(min_sc.shape, jnp.inf, min_sc.dtype)
        max_sc[...] = jnp.full(max_sc.shape, -jnp.inf, max_sc.dtype)

    # Interior blocks: pure VPU fold of sublane groups into (8, ln) accumulators.
    @pl.when(gblk < last)
    def _():
        x = x_ref[...].reshape(tr // 8, 8, ln)   # sublane-group split (layout no-op)
        min_sc[...] = jnp.minimum(min_sc[...], jnp.min(x, axis=0))
        max_sc[...] = jnp.maximum(max_sc[...], jnp.max(x, axis=0))

    # Last block: mask everything past the valid element count.  This covers
    # both the Pallas-padded rows of a partial block and any host-side pad.
    @pl.when(gblk == last)
    def _():
        row0 = gblk * tr
        rid = jax.lax.broadcasted_iota(jnp.int32, (tr, ln), 0)
        cid = jax.lax.broadcasted_iota(jnp.int32, (tr, ln), 1)
        valid = (row0 + rid) * ln + cid < n_valid
        xv = x_ref[...]
        xmin = jnp.where(valid, xv, jnp.inf).reshape(tr // 8, 8, ln)
        xmax = jnp.where(valid, xv, -jnp.inf).reshape(tr // 8, 8, ln)
        min_sc[...] = jnp.minimum(min_sc[...], jnp.min(xmin, axis=0))
        max_sc[...] = jnp.maximum(max_sc[...], jnp.max(xmax, axis=0))

    # One lane-dense (8, ln) partial per core; reduced to scalars in the wrapper.
    @pl.when(j == tpc - 1)
    def _():
        min_ref[...] = min_sc[...]
        max_ref[...] = max_sc[...]


def _global_min_max(x2d, n_valid, tile_rows, n_blocks, cfg):
    rows, lanes = x2d.shape
    n_split = _core_split(n_blocks, cfg["ncores"])
    tpc = n_blocks // n_split
    core_sem = _CORE_PARALLEL if n_split > 1 else _PARALLEL
    cost = pl.CostEstimate(flops=2 * n_valid, transcendentals=0,
                           bytes_accessed=4 * n_valid)
    mins, maxs = pl.pallas_call(
        functools.partial(_minmax_kernel, n_valid=n_valid),
        out_shape=(jax.ShapeDtypeStruct((8 * n_split, lanes), jnp.float32),
                   jax.ShapeDtypeStruct((8 * n_split, lanes), jnp.float32)),
        grid=(n_split, tpc),
        in_specs=[pl.BlockSpec((tile_rows, lanes),
                               lambda c, j: (c * tpc + j, 0))],
        out_specs=(pl.BlockSpec((8, lanes), lambda c, j: (c, 0)),
                   pl.BlockSpec((8, lanes), lambda c, j: (c, 0))),
        scratch_shapes=[pltpu.VMEM((8, lanes), jnp.float32),
                        pltpu.VMEM((8, lanes), jnp.float32)],
        compiler_params=_compiler_params((core_sem, _ARBITRARY),
                                         cfg["vmem_limit"]),
        cost_estimate=cost,
    )(x2d)
    return jnp.min(mins), jnp.max(maxs)


# ----------------------------------------------------------------------------
# Kernel 2: elementwise quantize  q = round(clip(x * inv_s + z, -128, 127)).int8
# ----------------------------------------------------------------------------
def _quantize_kernel(inv_s_ref, z_ref, x_ref, q_ref):
    inv_s = inv_s_ref[0]   # scalar 1/scale (f32, SMEM)
    z = z_ref[0]           # scalar zero point (f32, SMEM)
    y = x_ref[...] * inv_s + z
    y = jnp.clip(y, -128.0, 127.0)       # clamp first, then round (torch order)
    q_ref[...] = jnp.round(y).astype(jnp.int8)


def _quantize(x2d, inv_s, z_f32, tile_rows, n_blocks, cfg):
    rows, lanes = x2d.shape
    n_split = _core_split(n_blocks, cfg["ncores"])
    tpc = n_blocks // n_split
    core_sem = _CORE_PARALLEL if n_split > 1 else _PARALLEL
    n_elems = rows * lanes
    cost = pl.CostEstimate(flops=4 * n_elems, transcendentals=0,
                           bytes_accessed=5 * n_elems)
    return pl.pallas_call(
        _quantize_kernel,
        out_shape=jax.ShapeDtypeStruct((rows, lanes), jnp.int8),
        grid=(n_split, tpc),
        in_specs=[
            pl.BlockSpec(memory_space=pltpu.MemorySpace.SMEM),
            pl.BlockSpec(memory_space=pltpu.MemorySpace.SMEM),
            pl.BlockSpec((tile_rows, lanes), lambda c, j: (c * tpc + j, 0)),
        ],
        out_specs=pl.BlockSpec((tile_rows, lanes), lambda c, j: (c * tpc + j, 0)),
        compiler_params=_compiler_params((core_sem, _PARALLEL),
                                         cfg["vmem_limit"]),
        cost_estimate=cost,
    )(inv_s, z_f32, x2d)


# ----------------------------------------------------------------------------
# Scalar math (mirrors the PyTorch module exactly)
# ----------------------------------------------------------------------------
def _ema_update(batch_min, batch_max, running_min, running_max,
                momentum, first_batch):
    eps = jnp.float32(1e-6)
    mn = jnp.reshape(jnp.minimum(-eps, batch_min), (1,))
    mx = jnp.reshape(jnp.maximum(eps, batch_max), (1,))
    if first_batch:
        return mn, mx
    m = jnp.float32(momentum)
    return (mn * m + running_min * (1.0 - m),
            mx * m + running_max * (1.0 - m))


def _scale_and_zero_point(r_min, r_max):
    z = jnp.round(127.0 - r_max * 255.0 / (r_max - r_min)).astype(jnp.int8)
    s = r_max / (127.0 - z.astype(jnp.float32))
    return s, z


# ----------------------------------------------------------------------------
# Jitted forward paths (running stats handled functionally)
# ----------------------------------------------------------------------------
@functools.partial(jax.jit, static_argnames=("momentum", "first_batch"))
def _forward_stats(x, running_min, running_max, *, momentum, first_batch):
    cfg = _device_config()
    x2d, n, tile_rows, n_blocks = _prepare(x, cfg)
    mn, mx = _global_min_max(x2d, n, tile_rows, n_blocks, cfg)
    return _ema_update(mn, mx, running_min, running_max, momentum, first_batch)


@functools.partial(jax.jit, static_argnames=("momentum", "first_batch"))
def _forward_quantize_train(x, running_min, running_max, *, momentum, first_batch):
    cfg = _device_config()
    x2d, n, tile_rows, n_blocks = _prepare(x, cfg)
    mn, mx = _global_min_max(x2d, n, tile_rows, n_blocks, cfg)
    new_min, new_max = _ema_update(mn, mx, running_min, running_max,
                                   momentum, first_batch)
    s, z = _scale_and_zero_point(new_min, new_max)
    inv_s = (1.0 / s).astype(jnp.float32)
    q2d = _quantize(x2d, inv_s, z.astype(jnp.float32), tile_rows, n_blocks, cfg)
    q = _restore_shape(q2d, x.shape, n)
    return q, s, z, new_min, new_max


@jax.jit
def _forward_quantize_eval(x, running_min, running_max):
    cfg = _device_config()
    x2d, n, tile_rows, n_blocks = _prepare(x, cfg)
    s, z = _scale_and_zero_point(running_min, running_max)
    inv_s = (1.0 / s).astype(jnp.float32)
    q2d = _quantize(x2d, inv_s, z.astype(jnp.float32), tile_rows, n_blocks, cfg)
    q = _restore_shape(q2d, x.shape, n)
    return q, s, z


# ----------------------------------------------------------------------------
# Module-level glue (state handling mirrors the PyTorch module)
# ----------------------------------------------------------------------------
class QuantizedTensor:
    def __init__(self, q, s, z, r=None):
        self.q, self.s, self.z, self.r = q, s, z, r

    def dequantize(self):
        if self.r is not None:
            return self.r
        return self.s * (self.q.astype(jnp.int32) - self.z)

    def map(self, func):
        return QuantizedTensor(func(self.q), self.s, self.z,
                               None if self.r is None else func(self.r))

    def reshape(self, *shape):
        return self.map(lambda a: a.reshape(*shape))

    def permute(self, *perm):
        return self.map(lambda a: jnp.transpose(a, perm))

    @property
    def shape(self):
        return self.q.shape


class Quantize:
    def __init__(self, momentum=0.1, device=None):
        del device
        self.activation_quantization = False
        self.training = True
        self.momentum = float(momentum)
        self.running_min = jnp.zeros((1,), jnp.float32)
        self.running_max = jnp.zeros((1,), jnp.float32)
        self.num_batches_tracked = 0

    def forward(self, x):
        first = (self.num_batches_tracked == 0)
        if self.activation_quantization:
            if self.training:
                q, s, z, new_min, new_max = _forward_quantize_train(
                    x, self.running_min, self.running_max,
                    momentum=self.momentum, first_batch=first)
                self.running_min, self.running_max = new_min, new_max
                self.num_batches_tracked += 1
            else:
                assert self.num_batches_tracked >= 1
                q, s, z = _forward_quantize_eval(
                    x, self.running_min, self.running_max)
            return QuantizedTensor(q, s, z)
        else:
            if self.training:
                new_min, new_max = _forward_stats(
                    x, self.running_min, self.running_max,
                    momentum=self.momentum, first_batch=first)
                self.running_min, self.running_max = new_min, new_max
                self.num_batches_tracked += 1
            return x

    __call__ = forward


# ----------------------------------------------------------------------------
# Self-test
# ----------------------------------------------------------------------------
if __name__ == "__main__":
    key = jax.random.PRNGKey(0)
    x = jax.random.normal(key, (2, 4, 16, 16), dtype=jnp.float32)  # NCHW

    mod = Quantize(momentum=0.1)

    # pass 1: activation quantization off -> stats update only, returns input
    y0 = mod.forward(x)
    jax.block_until_ready(y0)
    assert y0.shape == x.shape

    # pass 2: activation quantization on -> EMA stats update + int8 quantize
    mod.activation_quantization = True
    out = mod.forward(x)
    jax.block_until_ready(out.q)

    # --- pure-JAX reference for the running stats (torch semantics) ---
    momentum = 0.1
    eps = jnp.float32(1e-6)
    mn = jnp.minimum(-eps, jnp.min(x))
    mx = jnp.maximum(eps, jnp.max(x))
    r_min, r_max = mn, mx                               # batch 1: copy
    r_min = mn * momentum + r_min * (1.0 - momentum)    # batch 2: EMA (same batch)
    r_max = mx * momentum + r_max * (1.0 - momentum)
    assert bool(jnp.allclose(mod.running_min[0], r_min, rtol=1e-6))
    assert bool(jnp.allclose(mod.running_max[0], r_max, rtol=1e-6))

    z_ref = jnp.round(127.0 - r_max * 255.0 / (r_max - r_min)).astype(jnp.int8)
    s_ref = r_max / (127.0 - z_ref.astype(jnp.float32))
    assert int(out.z[0]) == int(z_ref)
    assert bool(jnp.allclose(out.s[0], s_ref, rtol=1e-5))

    # exact elementwise check of the quantize kernel (same inv_s formulation)
    inv_s = (1.0 / out.s).astype(jnp.float32)
    q_ref = jnp.round(jnp.clip(x * inv_s + out.z.astype(jnp.float32),
                               -128.0, 127.0)).astype(jnp.int8)
    assert out.q.dtype == jnp.int8
    assert out.q.shape == x.shape
    assert bool(jnp.all(out.q == q_ref))

    # dequantize round-trip stays within one quantization step of the input
    assert bool(jnp.allclose(out.dequantize(), x, atol=float(out.s[0])))

    # Extra coverage: 128-lane path and the non-multiple-of-128 fallback
    # (exercises the in-kernel tail masking and the partial last block).
    for shape in [(2, 4, 4, 8), (3, 5, 7, 11)]:
        key, sub = jax.random.split(key)
        xs = jax.random.normal(sub, shape, dtype=jnp.float32)
        m2 = Quantize(momentum=0.1)
        m2.activation_quantization = True
        o2 = m2.forward(xs)
        jax.block_until_ready(o2.q)
        mn2 = jnp.minimum(-eps, jnp.min(xs))
        mx2 = jnp.maximum(eps, jnp.max(xs))
        assert bool(jnp.allclose(m2.running_min[0], mn2, rtol=1e-6))
        assert bool(jnp.allclose(m2.running_max[0], mx2, rtol=1e-6))
        inv2 = (1.0 / o2.s).astype(jnp.float32)
        qr2 = jnp.round(jnp.clip(xs * inv2 + o2.z.astype(jnp.float32),
                                 -128.0, 127.0)).astype(jnp.int8)
        assert o2.q.shape == shape and o2.q.dtype == jnp.int8
        assert bool(jnp.all(o2.q == qr2))

    print("KERNEL_OK")
</pallas_src>

<mosaic_0001>
module attributes {stable_mosaic.version = 11 : i64} {
  func.func @_minmax_kernel(%arg0: i32, %arg1: i32, %arg2: memref<32x512xf32, #tpu.memory_space<vmem>>, %arg3: memref<8x512xf32, #tpu.memory_space<vmem>>, %arg4: memref<8x512xf32, #tpu.memory_space<vmem>>, %arg5: memref<8x512xf32, #tpu.memory_space<vmem>>, %arg6: memref<8x512xf32, #tpu.memory_space<vmem>>) attributes {dimension_semantics = [#tpu.dimension_semantics<parallel>, #tpu.dimension_semantics<arbitrary>], iteration_bounds = array<i64: 1, 1>, scalar_prefetch = 0 : i64, scratch_operands = 2 : i64, tpu.core_type = #tpu.core_type<tc>, window_params = [{transform_indices = @transform_0, window_bounds = array<i64: 32, 512>}, {transform_indices = @transform_1, window_bounds = array<i64: 8, 512>}, {transform_indices = @transform_2, window_bounds = array<i64: 8, 512>}]} {
    %c1_i32 = arith.constant 1 : i32
    %0 = arith.muli %arg0, %c1_i32 : i32
    %1 = arith.addi %0, %arg1 : i32
    %c0_i32 = arith.constant 0 : i32
    %2 = arith.cmpi eq, %arg1, %c0_i32 : i32
    %3 = arith.extui %2 : i1 to i32
    %c0_i32_0 = arith.constant 0 : i32
    %4 = arith.cmpi ne, %3, %c0_i32_0 : i32
    scf.if %4 {
      %cst = arith.constant 0x7F800000 : f32
      %14 = vector.broadcast %cst : f32 to vector<8x512xf32>
      %c0 = arith.constant 0 : index
      %c0_7 = arith.constant 0 : index
      %15 = vector.load %arg5[%c0, %c0_7] : memref<8x512xf32, #tpu.memory_space<vmem>>, vector<8x512xf32>
      tpu.vector_store %arg5[%c0, %c0_7], %14 {strides = array<i32>} : memref<8x512xf32, #tpu.memory_space<vmem>>, vector<8x512xf32>,
      %cst_8 = arith.constant 0xFF800000 : f32
      %16 = vector.broadcast %cst_8 : f32 to vector<8x512xf32>
      %c0_9 = arith.constant 0 : index
      %c0_10 = arith.constant 0 : index
      %17 = vector.load %arg6[%c0_9, %c0_10] : memref<8x512xf32, #tpu.memory_space<vmem>>, vector<8x512xf32>
      tpu.vector_store %arg6[%c0_9, %c0_10], %16 {strides = array<i32>} : memref<8x512xf32, #tpu.memory_space<vmem>>, vector<8x512xf32>,
    } else {
    }
    %c0_i32_1 = arith.constant 0 : i32
    %5 = arith.cmpi slt, %1, %c0_i32_1 : i32
    %6 = arith.extui %5 : i1 to i32
    %c0_i32_2 = arith.constant 0 : i32
    %7 = arith.cmpi ne, %6, %c0_i32_2 : i32
    scf.if %7 {
      %c0 = arith.constant 0 : index
      %c0_7 = arith.constant 0 : index
      %14 = vector.load %arg2[%c0, %c0_7] : memref<32x512xf32, #tpu.memory_space<vmem>>, vector<32x512xf32>
      %15 = vector.shape_cast %14 : vector<32x512xf32> to vector<4x8x512xf32>
      %c0_8 = arith.constant 0 : index
      %c0_9 = arith.constant 0 : index
      %16 = vector.load %arg5[%c0_8, %c0_9] : memref<8x512xf32, #tpu.memory_space<vmem>>, vector<8x512xf32>
      %cst = arith.constant dense<0x7F800000> : vector<8x512xf32>
      %17 = vector.multi_reduction <minimumf>, %15, %cst [0] : vector<4x8x512xf32> to vector<8x512xf32>
      %18 = arith.minimumf %16, %17 : vector<8x512xf32>
      %c0_10 = arith.constant 0 : index
      %c0_11 = arith.constant 0 : index
      %19 = vector.load %arg5[%c0_10, %c0_11] : memref<8x512xf32, #tpu.memory_space<vmem>>, vector<8x512xf32>
      tpu.vector_store %arg5[%c0_10, %c0_11], %18 {strides = array<i32>} : memref<8x512xf32, #tpu.memory_space<vmem>>, vector<8x512xf32>,
      %c0_12 = arith.constant 0 : index
      %c0_13 = arith.constant 0 : index
      %20 = vector.load %arg6[%c0_12, %c0_13] : memref<8x512xf32, #tpu.memory_space<vmem>>, vector<8x512xf32>
      %cst_14 = arith.constant dense<0xFF800000> : vector<8x512xf32>
      %21 = vector.multi_reduction <maximumf>, %15, %cst_14 [0] : vector<4x8x512xf32> to vector<8x512xf32>
      %22 = arith.maximumf %20, %21 : vector<8x512xf32>
      %c0_15 = arith.constant 0 : index
      %c0_16 = arith.constant 0 : index
      %23 = vector.load %arg6[%c0_15, %c0_16] : memref<8x512xf32, #tpu.memory_space<vmem>>, vector<8x512xf32>
      tpu.vector_store %arg6[%c0_15, %c0_16], %22 {strides = array<i32>} : memref<8x512xf32, #tpu.memory_space<vmem>>, vector<8x512xf32>,
    } else {
    }
    %c0_i32_3 = arith.constant 0 : i32
    %8 = arith.cmpi eq, %1, %c0_i32_3 : i32
    %9 = arith.extui %8 : i1 to i32
    %c0_i32_4 = arith.constant 0 : i32
    %10 = arith.cmpi ne, %9, %c0_i32_4 : i32
    scf.if %10 {
      %c32_i32 = arith.constant 32 : i32
      %14 = arith.muli %1, %c32_i32 : i32
      %15 = tpu.iota {dimensions = array<i32: 0>} : vector<32x512xi32>
      %16 = tpu.iota {dimensions = array<i32: 1>} : vector<32x512xi32>
      %17 = vector.broadcast %14 : i32 to vector<32x512xi32>
      %18 = arith.addi %17, %15 : vector<32x512xi32>
      %c512_i32 = arith.constant 512 : i32
      %19 = vector.broadcast %c512_i32 : i32 to vector<32x512xi32>
      %20 = arith.muli %18, %19 : vector<32x512xi32>
      %21 = arith.addi %20, %16 : vector<32x512xi32>
      %c2048_i32 = arith.constant 2048 : i32
      %22 = vector.broadcast %c2048_i32 : i32 to vector<32x512xi32>
      %23 = arith.cmpi slt, %21, %22 : vector<32x512xi32>
      %c0 = arith.constant 0 : index
      %c0_7 = arith.constant 0 : index
      %24 = vector.load %arg2[%c0, %c0_7] : memref<32x512xf32, #tpu.memory_space<vmem>>, vector<32x512xf32>
      %cst = arith.constant 0x7F800000 : f32
      %25 = vector.broadcast %cst : f32 to vector<32x512xf32>
      %26 = arith.select %23, %24, %25 : vector<32x512xi1>, vector<32x512xf32>
      %27 = vector.shape_cast %26 : vector<32x512xf32> to vector<4x8x512xf32>
      %cst_8 = arith.constant 0xFF800000 : f32
      %28 = vector.broadcast %cst_8 : f32 to vector<32x512xf32>
      %29 = arith.select %23, %24, %28 : vector<32x512xi1>, vector<32x512xf32>
      %30 = vector.shape_cast %29 : vector<32x512xf32> to vector<4x8x512xf32>
      %c0_9 = arith.constant 0 : index
      %c0_10 = arith.constant 0 : index
      %31 = vector.load %arg5[%c0_9, %c0_10] : memref<8x512xf32, #tpu.memory_space<vmem>>, vector<8x512xf32>
      %cst_11 = arith.constant dense<0x7F800000> : vector<8x512xf32>
      %32 = vector.multi_reduction <minimumf>, %27, %cst_11 [0] : vector<4x8x512xf32> to vector<8x512xf32>
      %33 = arith.minimumf %31, %32 : vector<8x512xf32>
      %c0_12 = arith.constant 0 : index
      %c0_13 = arith.constant 0 : index
      %34 = vector.load %arg5[%c0_12, %c0_13] : memref<8x512xf32, #tpu.memory_space<vmem>>, vector<8x512xf32>
      tpu.vector_store %arg5[%c0_12, %c0_13], %33 {strides = array<i32>} : memref<8x512xf32, #tpu.memory_space<vmem>>, vector<8x512xf32>,
      %c0_14 = arith.constant 0 : index
      %c0_15 = arith.constant 0 : index
      %35 = vector.load %arg6[%c0_14, %c0_15] : memref<8x512xf32, #tpu.memory_space<vmem>>, vector<8x512xf32>
      %cst_16 = arith.constant dense<0xFF800000> : vector<8x512xf32>
      %36 = vector.multi_reduction <maximumf>, %30, %cst_16 [0] : vector<4x8x512xf32> to vector<8x512xf32>
      %37 = arith.maximumf %35, %36 : vector<8x512xf32>
      %c0_17 = arith.constant 0 : index
      %c0_18 = arith.constant 0 : index
      %38 = vector.load %arg6[%c0_17, %c0_18] : memref<8x512xf32, #tpu.memory_space<vmem>>, vector<8x512xf32>
      tpu.vector_store %arg6[%c0_17, %c0_18], %37 {strides = array<i32>} : memref<8x512xf32, #tpu.memory_space<vmem>>, vector<8x512xf32>,
    } else {
    }
    %c0_i32_5 = arith.constant 0 : i32
    %11 = arith.cmpi eq, %arg1, %c0_i32_5 : i32
    %12 = arith.extui %11 : i1 to i32
    %c0_i32_6 = arith.constant 0 : i32
    %13 = arith.cmpi ne, %12, %c0_i32_6 : i32
    scf.if %13 {
      %c0 = arith.constant 0 : index
      %c0_7 = arith.constant 0 : index
      %14 = vector.load %arg5[%c0, %c0_7] : memref<8x512xf32, #tpu.memory_space<vmem>>, vector<8x512xf32>
      %c0_8 = arith.constant 0 : index
      %c0_9 = arith.constant 0 : index
      %15 = vector.load %arg3[%c0_8, %c0_9] : memref<8x512xf32, #tpu.memory_space<vmem>>, vector<8x512xf32>
      tpu.vector_store %arg3[%c0_8, %c0_9], %14 {strides = array<i32>} : memref<8x512xf32, #tpu.memory_space<vmem>>, vector<8x512xf32>,
      %c0_10 = arith.constant 0 : index
      %c0_11 = arith.constant 0 : index
      %16 = vector.load %arg6[%c0_10, %c0_11] : memref<8x512xf32, #tpu.memory_space<vmem>>, vector<8x512xf32>
      %c0_12 = arith.constant 0 : index
      %c0_13 = arith.constant 0 : index
      %17 = vector.load %arg4[%c0_12, %c0_13] : memref<8x512xf32, #tpu.memory_space<vmem>>, vector<8x512xf32>
      tpu.vector_store %arg4[%c0_12, %c0_13], %16 {strides = array<i32>} : memref<8x512xf32, #tpu.memory_space<vmem>>, vector<8x512xf32>,
    } else {
    }
    return
  }
  func.func @transform_0(%arg0: i32, %arg1: i32) -> (i32, i32) {
    %c1_i32 = arith.constant 1 : i32
    %0 = arith.muli %arg0, %c1_i32 : i32
    %1 = arith.addi %0, %arg1 : i32
    %c0_i32 = arith.constant 0 : i32
    %c0_i32_0 = arith.constant 0 : i32
    return %1, %c0_i32 : i32, i32
  }
  func.func @transform_1(%arg0: i32, %arg1: i32) -> (i32, i32) {
    %c0_i32 = arith.constant 0 : i32
    %c0_i32_0 = arith.constant 0 : i32
    return %arg0, %c0_i32 : i32, i32
  }
  func.func @transform_2(%arg0: i32, %arg1: i32) -> (i32, i32) {
    %c0_i32 = arith.constant 0 : i32
    %c0_i32_0 = arith.constant 0 : i32
    return %arg0, %c0_i32 : i32, i32
  }
}

</mosaic_0001>

<llo_original>
// kernel: _forward_stats.1
$region0: #{_forward_stats.1}
  #allocation0 [shape = 'u32[]', space=smem, size = 0x4, offset = 0x4, fixed_abs, tag = 'smem constant byte address 0x4 - core index']
  #allocation1 [shape = 'u32[144,128]{1,0:T(1,128)}', space=vmem, size = 0x12000, scoped, tag = 'internal scratch']
  #allocation2 [shape = 'f32[8,512]{1,0:T(8,128)}', space=vmem, size = 0x4000, scoped, tag = 'scratch operand']
  #allocation3 [shape = 'f32[8,512]{1,0:T(8,128)}', space=vmem, size = 0x4000, scoped, tag = 'scratch operand']
  %s0 = inlined_call_operand.vmem [shape: f32[4,512], index: 0, kind: input, shape index: {}]
  %s1 = inlined_call_operand.vmem [shape: f32[8,512], index: 1, kind: output, shape index: {0}]
  %s2 = inlined_call_operand.vmem [shape: f32[8,512], index: 2, kind: output, shape index: {1}]
  %3 = xla_tuple %s1, %s2
  %s4 = sld [smem:[#allocation0]]
  $region38: #{_forward_stats.1} parent=0
    _
  %s6 = ssub.s32 1, %s4
  %s7 = scalar_select 0, %s6, %s4
  // Predicated region
  $region2: #{_forward_stats.1} parent=0 // pred_check
    _
  $region3: #{_forward_stats.1} parent=0 // pred_check_branch
    %9 = sbr.rel (0) target = $region5
  $region4: #{_forward_stats.1} parent=0 // pred_region
    %s10 = sadd.s32 0, 0
    %s11 = smul.u32 8, %s10
    %s12 = ssub.s32 1, %s11
    %s13 = smul.u32 64, %s12
    %s14 = smul.u32 %s13, 4
    %p15 = scmp.lt.s32.totalorder %s11, 0
    %s16 = scalar_select %p15, %s11, 0
    %s17 = smul.addr %s16, 4
    %s18 = smul.addr %s17, 4
    %s19 = scalar_lea.vmem %s0, %s18
    %s20 = sadd.s32 0, 0
    %s21 = smul.u32 8, %s20
    %s22 = ssub.s32 1, %s21
    %s23 = smul.u32 64, %s22
    %s24 = smul.u32 %s23, 4
  $region5: #{_forward_stats.1} parent=0 // pred_fallthru
    _
  %s25 = sadd.s32 0, 0
  %s26 = smul.u32 8, %s25
  %s27 = ssub.s32 1, %s26
  %s28 = smul.u32 64, %s27
  %s29 = smul.u32 %s28, 4
  %p30 = scmp.lt.s32.totalorder %s26, 0
  %s31 = scalar_select %p30, %s26, 0
  %s32 = smul.addr %s31, 4
  %s33 = smul.addr %s32, 4
  %s34 = scalar_lea.vmem %s0, %s33
  %s35 = sadd.s32 0, 0
  %s36 = smul.u32 8, %s35
  %s37 = ssub.s32 1, %s36
  %s38 = smul.u32 64, %s37
  %s39 = smul.u32 %s38, 4
  %p40 = scmp.lt.s32.totalorder %s36, 0
  %s41 = scalar_select %p40, %s36, 0
  %s42 = smul.addr %s41, 4
  %s43 = smul.addr %s42, 4
  %s44 = scalar_lea.vmem %s0, %s43
  %s45 = sadd.s32 0, 0
  %s46 = smul.u32 8, %s45
  %s47 = ssub.s32 1, %s46
  %s48 = smul.u32 64, %s47
  %s49 = smul.u32 %s48, 4
  %s50 = sadd.s32 0, 0
  %p51 = scmp.eq.s32.totalorder 0, 0
  // Predicated region
  $region6: #{_forward_stats.1} parent=0 // pred_check
    %p52 = pneg %p51
  $region7: #{_forward_stats.1} parent=0 // pred_check_branch
    %54 = sbr.rel (%p52) target = $region9
  $region8: #{_forward_stats.1} parent=0 // pred_region
    %55 = vst [vmem:[#allocation2] sm:$0xff] inf
    %56 = vst [vmem:[#allocation2 + $0x8] sm:$0xff] inf
    %57 = vst [vmem:[#allocation2 + $0x10] sm:$0xff] inf
    %58 = vst [vmem:[#allocation2 + $0x18] sm:$0xff] inf
    %59 = vst [vmem:[#allocation3] sm:$0xff] -inf
    %60 = vst [vmem:[#allocation3 + $0x8] sm:$0xff] -inf
    %61 = vst [vmem:[#allocation3 + $0x10] sm:$0xff] -inf
    %62 = vst [vmem:[#allocation3 + $0x18] sm:$0xff] -inf
  $region9: #{_forward_stats.1} parent=0 // pred_fallthru
    _
  %p63 = scmp.lt.s32.totalorder %s50, 0
  // Predicated region
  $region10: #{_forward_stats.1} parent=0 // pred_check
    %p64 = pneg %p63
  $region11: #{_forward_stats.1} parent=0 // pred_check_branch
    %66 = sbr.rel (%p64) target = $region13
  $region12: #{_forward_stats.1} parent=0 // pred_region
    %v67 = vld [vmem:[%s44] sm:$0xff]
    %v68 = vld [vmem:[%s44 + $0x8] sm:$0xff]
    %v69 = vld [vmem:[%s44 + $0x10] sm:$0xff]
    %v70 = vld [vmem:[%s44 + $0x18] sm:$0xff]
    %v71 = vld [vmem:[%s44 + $0x20] sm:$0xff]
    %v72 = vld [vmem:[%s44 + $0x28] sm:$0xff]
    %v73 = vld [vmem:[%s44 + $0x30] sm:$0xff]
    %v74 = vld [vmem:[%s44 + $0x38] sm:$0xff]
    %v75 = vld [vmem:[%s44 + $0x40] sm:$0xff]
    %v76 = vld [vmem:[%s44 + $0x48] sm:$0xff]
    %v77 = vld [vmem:[%s44 + $0x50] sm:$0xff]
    %v78 = vld [vmem:[%s44 + $0x58] sm:$0xff]
    %v79 = vld [vmem:[%s44 + $0x60] sm:$0xff]
    %v80 = vld [vmem:[%s44 + $0x68] sm:$0xff]
    %v81 = vld [vmem:[%s44 + $0x70] sm:$0xff]
    %v82 = vld [vmem:[%s44 + $0x78] sm:$0xff]
    %v83 = vld [vmem:[#allocation2] sm:$0xff]
    %v84 = vld [vmem:[#allocation2 + $0x8] sm:$0xff]
    %v85 = vld [vmem:[#allocation2 + $0x10] sm:$0xff]
    %v86 = vld [vmem:[#allocation2 + $0x18] sm:$0xff]
    %v87 = vmin.f32 %v67, %v71
    %v88 = vmin.f32 %v87, %v75
    %v89 = vmin.f32 %v88, %v79
    %v90 = vmin.f32 %v68, %v72
    %v91 = vmin.f32 %v90, %v76
    %v92 = vmin.f32 %v91, %v80
    %v93 = vmin.f32 %v69, %v73
    %v94 = vmin.f32 %v93, %v77
    %v95 = vmin.f32 %v94, %v81
    %v96 = vmin.f32 %v70, %v74
    %v97 = vmin.f32 %v96, %v78
    %v98 = vmin.f32 %v97, %v82
    %v103 = vcombine.low %v89, %v95
    %v104 = vcombine.high %v89, %v95
    %v105 = vcombine.low %v92, %v98
    %v106 = vcombine.high %v92, %v98
    %v111 = vmin.f32 %v83, %v103
    %v112 = vmin.f32 %v84, %v104
    %v113 = vmin.f32 %v85, %v105
    %v114 = vmin.f32 %v86, %v106
    %115 = vst [vmem:[#allocation2] sm:$0xff] %v111
    %116 = vst [vmem:[#allocation2 + $0x8] sm:$0xff] %v112
    %117 = vst [vmem:[#allocation2 + $0x10] sm:$0xff] %v113
    %118 = vst [vmem:[#allocation2 + $0x18] sm:$0xff] %v114
    %v119 = vld [vmem:[#allocation3] sm:$0xff]
    %v120 = vld [vmem:[#allocation3 + $0x8] sm:$0xff]
    %v121 = vld [vmem:[#allocation3 + $0x10] sm:$0xff]
    %v122 = vld [vmem:[#allocation3 + $0x18] sm:$0xff]
    %v123 = vmax.f32 %v67, %v71
    %v124 = vmax.f32 %v123, %v75
    %v125 = vmax.f32 %v124, %v79
    %v126 = vmax.f32 %v68, %v72
    %v127 = vmax.f32 %v126, %v76
    %v128 = vmax.f32 %v127, %v80
    %v129 = vmax.f32 %v69, %v73
    %v130 = vmax.f32 %v129, %v77
    %v131 = vmax.f32 %v130, %v81
    %v132 = vmax.f32 %v70, %v74
    %v133 = vmax.f32 %v132, %v78
    %v134 = vmax.f32 %v133, %v82
    %v139 = vcombine.low %v125, %v131
    %v140 = vcombine.high %v125, %v131
    %v141 = vcombine.low %v128, %v134
    %v142 = vcombine.high %v128, %v134
    %v147 = vmax.f32 %v119, %v139
    %v148 = vmax.f32 %v120, %v140
    %v149 = vmax.f32 %v121, %v141
    %v150 = vmax.f32 %v122, %v142
    %151 = vst [vmem:[#allocation3] sm:$0xff] %v147
    %152 = vst [vmem:[#allocation3 + $0x8] sm:$0xff] %v148
    %153 = vst [vmem:[#allocation3 + $0x10] sm:$0xff] %v149
    %154 = vst [vmem:[#allocation3 + $0x18] sm:$0xff] %v150
  $region13: #{_forward_stats.1} parent=0 // pred_fallthru
    _
  %p155 = scmp.eq.s32.totalorder %s50, 0
  // Predicated region
  $region14: #{_forward_stats.1} parent=0 // pred_check
    %p156 = pneg %p155
  $region15: #{_forward_stats.1} parent=0 // pred_check_branch
    %158 = sbr.rel (%p156) target = $region17
  $region16: #{_forward_stats.1} parent=0 // pred_region
    %s159 = smul.u32 %s50, 32
    %v160 = vlaneseq
    %v161 = vshrl.u32 %v160, 7
    %v162 = vadd.s32 %v161, 8
    %v163 = vadd.s32 %v161, 16
    %v164 = vadd.s32 %v161, 24
    %v165 = vlaneseq
    %v166 = vand.u32 %v165, 127
    %v167 = vadd.s32 %v166, 128
    %v168 = vadd.s32 %v166, 256
    %v169 = vadd.s32 %v166, 384
    %v170 = vstv %s159
    %v171 = vadd.s32 %v170, %v161
    %v172 = vadd.s32 %v170, %v162
    %v173 = vadd.s32 %v170, %v163
    %v174 = vadd.s32 %v170, %v164
    %v175 = vmul.u32 %v171, 512
    %v176 = vmul.u32 %v172, 512
    %v177 = vmul.u32 %v173, 512
    %v178 = vmul.u32 %v174, 512
    %v179 = vadd.s32 %v175, %v166
    %v180 = vadd.s32 %v175, %v167
    %v181 = vadd.s32 %v175, %v168
    %v182 = vadd.s32 %v175, %v169
    %v183 = vadd.s32 %v176, %v166
    %v184 = vadd.s32 %v176, %v167
    %v185 = vadd.s32 %v176, %v168
    %v186 = vadd.s32 %v176, %v169
    %v187 = vadd.s32 %v177, %v166
    %v188 = vadd.s32 %v177, %v167
    %v189 = vadd.s32 %v177, %v168
    %v190 = vadd.s32 %v177, %v169
    %v191 = vadd.s32 %v178, %v166
    %v192 = vadd.s32 %v178, %v167
    %v193 = vadd.s32 %v178, %v168
    %v194 = vadd.s32 %v178, %v169
    %vm195 = vcmp.lt.s32.totalorder %v179, 2048
    %vm196 = vcmp.lt.s32.totalorder %v180, 2048
    %vm197 = vcmp.lt.s32.totalorder %v181, 2048
    %vm198 = vcmp.lt.s32.totalorder %v182, 2048
    %vm199 = vcmp.lt.s32.totalorder %v183, 2048
    %vm200 = vcmp.lt.s32.totalorder %v184, 2048
    %vm201 = vcmp.lt.s32.totalorder %v185, 2048
    %vm202 = vcmp.lt.s32.totalorder %v186, 2048
    %vm203 = vcmp.lt.s32.totalorder %v187, 2048
    %vm204 = vcmp.lt.s32.totalorder %v188, 2048
    %vm205 = vcmp.lt.s32.totalorder %v189, 2048
    %vm206 = vcmp.lt.s32.totalorder %v190, 2048
    %vm207 = vcmp.lt.s32.totalorder %v191, 2048
    %vm208 = vcmp.lt.s32.totalorder %v192, 2048
    %vm209 = vcmp.lt.s32.totalorder %v193, 2048
    %vm210 = vcmp.lt.s32.totalorder %v194, 2048
    %v211 = vld [vmem:[%s44] sm:$0xff]
    %v212 = vld [vmem:[%s44 + $0x8] sm:$0xff]
    %v213 = vld [vmem:[%s44 + $0x10] sm:$0xff]
    %v214 = vld [vmem:[%s44 + $0x18] sm:$0xff]
    %v215 = vld [vmem:[%s44 + $0x20] sm:$0xff]
    %v216 = vld [vmem:[%s44 + $0x28] sm:$0xff]
    %v217 = vld [vmem:[%s44 + $0x30] sm:$0xff]
    %v218 = vld [vmem:[%s44 + $0x38] sm:$0xff]
    %v219 = vld [vmem:[%s44 + $0x40] sm:$0xff]
    %v220 = vld [vmem:[%s44 + $0x48] sm:$0xff]
    %v221 = vld [vmem:[%s44 + $0x50] sm:$0xff]
    %v222 = vld [vmem:[%s44 + $0x58] sm:$0xff]
    %v223 = vld [vmem:[%s44 + $0x60] sm:$0xff]
    %v224 = vld [vmem:[%s44 + $0x68] sm:$0xff]
    %v225 = vld [vmem:[%s44 + $0x70] sm:$0xff]
    %v226 = vld [vmem:[%s44 + $0x78] sm:$0xff]
    %v243 = vcombine.low %v211, %v213
    %v244 = vcombine.high %v211, %v213
    %v245 = vcombine.low %v212, %v214
    %v246 = vcombine.high %v212, %v214
    %v247 = vcombine.low %v215, %v217
    %v248 = vcombine.high %v215, %v217
    %v249 = vcombine.low %v216, %v218
    %v250 = vcombine.high %v216, %v218
    %v251 = vcombine.low %v219, %v221
    %v252 = vcombine.high %v219, %v221
    %v253 = vcombine.low %v220, %v222
    %v254 = vcombine.high %v220, %v222
    %v255 = vcombine.low %v223, %v225
    %v256 = vcombine.high %v223, %v225
    %v257 = vcombine.low %v224, %v226
    %v258 = vcombine.high %v224, %v226
    %v275 = vsel %vm195, %v243, inf
    %v276 = vsel %vm196, %v244, inf
    %v277 = vsel %vm197, %v245, inf
    %v278 = vsel %vm198, %v246, inf
    %v279 = vsel %vm199, %v247, inf
    %v280 = vsel %vm200, %v248, inf
    %v281 = vsel %vm201, %v249, inf
    %v282 = vsel %vm202, %v250, inf
    %v283 = vsel %vm203, %v251, inf
    %v284 = vsel %vm204, %v252, inf
    %v285 = vsel %vm205, %v253, inf
    %v286 = vsel %vm206, %v254, inf
    %v287 = vsel %vm207, %v255, inf
    %v288 = vsel %vm208, %v256, inf
    %v289 = vsel %vm209, %v257, inf
    %v290 = vsel %vm210, %v258, inf
    %v291 = vsel %vm195, %v243, -inf
    %v292 = vsel %vm196, %v244, -inf
    %v293 = vsel %vm197, %v245, -inf
    %v294 = vsel %vm198, %v246, -inf
    %v295 = vsel %vm199, %v247, -inf
    %v296 = vsel %vm200, %v248, -inf
    %v297 = vsel %vm201, %v249, -inf
    %v298 = vsel %vm202, %v250, -inf
    %v299 = vsel %vm203, %v251, -inf
    %v300 = vsel %vm204, %v252, -inf
    %v301 = vsel %vm205, %v253, -inf
    %v302 = vsel %vm206, %v254, -inf
    %v303 = vsel %vm207, %v255, -inf
    %v304 = vsel %vm208, %v256, -inf
    %v305 = vsel %vm209, %v257, -inf
    %v306 = vsel %vm210, %v258, -inf
    %v307 = vld [vmem:[#allocation2] sm:$0xff]
    %v308 = vld [vmem:[#allocation2 + $0x8] sm:$0xff]
    %v309 = vld [vmem:[#allocation2 + $0x10] sm:$0xff]
    %v310 = vld [vmem:[#allocation2 + $0x18] sm:$0xff]
    %v311 = vmin.f32 %v275, %v279
    %v312 = vmin.f32 %v311, %v283
    %v313 = vmin.f32 %v312, %v287
    %v314 = vmin.f32 %v276, %v280
    %v315 = vmin.f32 %v314, %v284
    %v316 = vmin.f32 %v315, %v288
    %v317 = vmin.f32 %v277, %v281
    %v318 = vmin.f32 %v317, %v285
    %v319 = vmin.f32 %v318, %v289
    %v320 = vmin.f32 %v278, %v282
    %v321 = vmin.f32 %v320, %v286
    %v322 = vmin.f32 %v321, %v290
    %v323 = vmin.f32 %v307, %v313
    %v324 = vmin.f32 %v308, %v316
    %v325 = vmin.f32 %v309, %v319
    %v326 = vmin.f32 %v310, %v322
    %327 = vst [vmem:[#allocation2] sm:$0xff] %v323
    %328 = vst [vmem:[#allocation2 + $0x8] sm:$0xff] %v324
    %329 = vst [vmem:[#allocation2 + $0x10] sm:$0xff] %v325
    %330 = vst [vmem:[#allocation2 + $0x18] sm:$0xff] %v326
    %v331 = vld [vmem:[#allocation3] sm:$0xff]
    %v332 = vld [vmem:[#allocation3 + $0x8] sm:$0xff]
    %v333 = vld [vmem:[#allocation3 + $0x10] sm:$0xff]
    %v334 = vld [vmem:[#allocation3 + $0x18] sm:$0xff]
    %v335 = vmax.f32 %v291, %v295
    %v336 = vmax.f32 %v335, %v299
    %v337 = vmax.f32 %v336, %v303
    %v338 = vmax.f32 %v292, %v296
    %v339 = vmax.f32 %v338, %v300
    %v340 = vmax.f32 %v339, %v304
    %v341 = vmax.f32 %v293, %v297
    %v342 = vmax.f32 %v341, %v301
    %v343 = vmax.f32 %v342, %v305
    %v344 = vmax.f32 %v294, %v298
    %v345 = vmax.f32 %v344, %v302
    %v346 = vmax.f32 %v345, %v306
    %v347 = vmax.f32 %v331, %v337
    %v348 = vmax.f32 %v332, %v340
    %v349 = vmax.f32 %v333, %v343
    %v350 = vmax.f32 %v334, %v346
    %351 = vst [vmem:[#allocation3] sm:$0xff] %v347
    %352 = vst [vmem:[#allocation3 + $0x8] sm:$0xff] %v348
    %353 = vst [vmem:[#allocation3 + $0x10] sm:$0xff] %v349
    %354 = vst [vmem:[#allocation3 + $0x18] sm:$0xff] %v350
  $region17: #{_forward_stats.1} parent=0 // pred_fallthru
    _
  // Predicated region
  $region18: #{_forward_stats.1} parent=0 // pred_check
    %p355 = pneg %p51
  $region19: #{_forward_stats.1} parent=0 // pred_check_branch
    %357 = sbr.rel (%p355) target = $region21
  $region20: #{_forward_stats.1} parent=0 // pred_region
    %v358 = vld [vmem:[#allocation2] sm:$0xff]
    %v359 = vld [vmem:[#allocation2 + $0x8] sm:$0xff]
    %v360 = vld [vmem:[#allocation2 + $0x10] sm:$0xff]
    %v361 = vld [vmem:[#allocation2 + $0x18] sm:$0xff]
    %362 = vst [vmem:[%s1] sm:$0xff] %v358
    %363 = vst [vmem:[%s1 + $0x8] sm:$0xff] %v359
    %364 = vst [vmem:[%s1 + $0x10] sm:$0xff] %v360
    %365 = vst [vmem:[%s1 + $0x18] sm:$0xff] %v361
    %v366 = vld [vmem:[#allocation3] sm:$0xff]
    %v367 = vld [vmem:[#allocation3 + $0x8] sm:$0xff]
    %v368 = vld [vmem:[#allocation3 + $0x10] sm:$0xff]
    %v369 = vld [vmem:[#allocation3 + $0x18] sm:$0xff]
    %370 = vst [vmem:[%s2] sm:$0xff] %v366
    %371 = vst [vmem:[%s2 + $0x8] sm:$0xff] %v367
    %372 = vst [vmem:[%s2 + $0x10] sm:$0xff] %v368
    %373 = vst [vmem:[%s2 + $0x18] sm:$0xff] %v369
  $region21: #{_forward_stats.1} parent=0 // pred_fallthru
    _
  // Predicated region
  $region22: #{_forward_stats.1} parent=0 // pred_check
    _
  $region23: #{_forward_stats.1} parent=0 // pred_check_branch
    %375 = sbr.rel (0) target = $region25
  $region24: #{_forward_stats.1} parent=0 // pred_region
    _
  $region25: #{_forward_stats.1} parent=0 // pred_fallthru
    _
  // Predicated region
  $region26: #{_forward_stats.1} parent=0 // pred_check
    _
  $region27: #{_forward_stats.1} parent=0 // pred_check_branch
    %377 = sbr.rel (0) target = $region29
  $region28: #{_forward_stats.1} parent=0 // pred_region
    _
  $region29: #{_forward_stats.1} parent=0 // pred_fallthru
    _
  // Predicated region
  $region30: #{_forward_stats.1} parent=0 // pred_check
    _
  $region31: #{_forward_stats.1} parent=0 // pred_check_branch
    %379 = sbr.rel (0) target = $region33
  $region32: #{_forward_stats.1} parent=0 // pred_region
    _
  $region33: #{_forward_stats.1} parent=0 // pred_fallthru
    _
  // Predicated region
  $region34: #{_forward_stats.1} parent=0 // pred_check
    _
  $region35: #{_forward_stats.1} parent=0 // pred_check_branch
    %381 = sbr.rel (0) target = $region37
  $region36: #{_forward_stats.1} parent=0 // pred_region
    _
  $region37: #{_forward_stats.1} parent=0 // pred_fallthru
    _

</llo_original>
